<compile_context>
chip_gen: v6e
topology: v6e:2x2x1
jax: 0.10.0
libtpu: 0.0.40
codegen_flags: <defaults>
</compile_context>

<pallas_src>
import functools

import jax
import jax.numpy as jnp
from jax import lax
from jax.experimental import pallas as pl
from jax.experimental.pallas import tpu as pltpu


def _round_up(x, m):
    return ((x + m - 1) // m) * m


def _log_sigmoid(z):
    # numerically stable log(sigmoid(z)) = -softplus(-z)
    return -(jnp.maximum(-z, 0.0) + jnp.log1p(jnp.exp(-jnp.abs(z))))


def _unsup_loss_kernel(xr_ref, xct_ref, m_ref, invp_ref, invn_ref, out_ref):
    xr = xr_ref[...]                         # (TM, Dp)  rows of this block
    xct = xct_ref[...]                       # (Dp, Np)  all embeddings, transposed (resident)
    mf = m_ref[...].astype(jnp.float32)      # (TM, Np)  0 = none, 1 = pos, 2 = neg
    inv_p = invp_ref[...]                    # (TM, 1)   1/#neighbors   (inf if 0 -> NaN, like torch)
    inv_n = invn_ref[...]                    # (TM, 1)   1/#neg samples

    # Gram block S[v, u] = x_v . x_u  (MXU, standard (TM,Dp)@(Dp,Np))
    s = jnp.dot(xr, xct, preferred_element_type=jnp.float32)   # (TM, Np)

    # single logsigmoid per entry; logsigmoid(-s) = ls - s (exact identity)
    ls = _log_sigmoid(s)

    # reconstruct per-row-mean weights from the packed mask (VPU-cheap)
    pos_f = (mf == 1.0).astype(jnp.float32)
    neg_f = (mf == 2.0).astype(jnp.float32)
    w_pos = pos_f * inv_p                    # rows with 0 neighbors: 0 * inf = NaN (torch semantics)
    w_neg = neg_f * inv_n

    # block partial of sum_v [ -mean_pos ls - mean_neg (ls - s) ]
    out_ref[0, 0] = jnp.sum(w_neg * s - (w_pos + w_neg) * ls)


def _build_masks(A, key, k=20):
    """pos/neg sampling glue (plain JAX). Returns bool pos_mask, neg_mask (N, N)."""
    N = A.shape[0]
    pos = (A == 1.0)
    non_neigh = (A == 0.0)

    # random k-subset of non-neighbors per row via one top_k (no full argsorts)
    u = jax.random.uniform(key, (N, N))
    scores = jnp.where(non_neigh, u, 2.0)            # neighbors get sentinel 2.0
    kk = min(int(k), N)
    top_vals, top_idx = lax.top_k(-scores, kk)       # kk smallest scores per row
    valid = top_vals > -1.5                          # drop neighbor sentinels
    rows = jnp.arange(N)[:, None]
    neg = jnp.zeros((N, N), jnp.bool_).at[rows, top_idx].set(valid)
    return pos, neg


@functools.partial(jax.jit, static_argnames=("k", "block_rows"))
def unsupervised_loss(X, A, key, k=20, block_rows=256):
    """X: (1, N, D), A: (1, N, N). Returns scalar loss."""
    X = jnp.squeeze(X, axis=0).astype(jnp.float32)   # (N, D)
    A = jnp.squeeze(A, axis=0).astype(jnp.float32)   # (N, N)
    N, D = X.shape

    pos, neg = _build_masks(A, key, k=k)

    # packed int8 mask (pos/neg disjoint) + per-row inverse counts.
    # Empty neighbor / non-neighbor sets give inf here -> NaN in-kernel, like torch.
    mask = pos.astype(jnp.int8) + 2 * neg.astype(jnp.int8)
    inv_pos = 1.0 / jnp.sum(pos, axis=-1).astype(jnp.float32)
    inv_neg = 1.0 / jnp.sum(neg, axis=-1).astype(jnp.float32)

    # ---- pad to MXU / lane friendly geometry ----
    TM = int(block_rows) if N > int(block_rows) else 128   # row tile (multiple of 128)
    Np = _round_up(N, TM)                                  # padded node count
    Dp = _round_up(D, 128)                                 # padded feature dim

    Xp = jnp.zeros((Np, Dp), jnp.float32).at[:N, :D].set(X)
    XpT = Xp.T                                             # (Dp, Np) for transpose-free MXU feed
    Mp = jnp.zeros((Np, Np), jnp.int8).at[:N, :N].set(mask)
    InvP = jnp.zeros((Np, 1), jnp.float32).at[:N, 0].set(inv_pos)   # padded rows -> 0 (no NaN)
    InvN = jnp.zeros((Np, 1), jnp.float32).at[:N, 0].set(inv_neg)

    num_blocks = Np // TM

    partials = pl.pallas_call(
        _unsup_loss_kernel,
        out_shape=jax.ShapeDtypeStruct((num_blocks, 1), jnp.float32),
        grid_spec=pltpu.PrefetchScalarGridSpec(
            num_scalar_prefetch=0,
            grid=(num_blocks,),
            in_specs=[
                pl.BlockSpec((TM, Dp), lambda i: (i, 0)),   # X rows of this block
                pl.BlockSpec((Dp, Np), lambda i: (0, 0)),   # X^T, resident across grid
                pl.BlockSpec((TM, Np), lambda i: (i, 0)),   # packed int8 mask block
                pl.BlockSpec((TM, 1), lambda i: (i, 0)),    # 1/#neighbors
                pl.BlockSpec((TM, 1), lambda i: (i, 0)),    # 1/#neg samples
            ],
            out_specs=pl.BlockSpec(
                (1, 1), lambda i: (i, 0),
                memory_space=pltpu.MemorySpace.SMEM,        # per-block scalar partial
            ),
        ),
        compiler_params=pltpu.CompilerParams(
            dimension_semantics=("parallel",),              # shard row blocks across TCs
            vmem_limit_bytes=64 * 1024 * 1024,
        ),
        cost_estimate=pl.CostEstimate(
            flops=2 * Np * Np * Dp,
            transcendentals=2 * Np * Np,                    # exp + log1p per gram entry
            bytes_accessed=Np * Np                           # int8 mask
            + 2 * Np * Dp * 4                                # X and X^T
            + 2 * Np * 4                                     # inverse counts
            + num_blocks * 4,
        ),
    )(Xp, XpT, Mp, InvP, InvN)

    return jnp.sum(partials)


def _reference_loss(X, pos_mask, neg_mask):
    """Pure-JAX reference with identical masks (for correctness check)."""
    s = X @ X.T
    ls_pos = _log_sigmoid(s)
    ls_neg = _log_sigmoid(-s)
    pos_f = pos_mask.astype(jnp.float32)
    neg_f = neg_mask.astype(jnp.float32)
    pos_term = -jnp.sum(pos_f * ls_pos, axis=-1) / jnp.sum(pos_f, axis=-1)
    neg_term = -jnp.sum(neg_f * ls_neg, axis=-1) / jnp.sum(neg_f, axis=-1)
    return jnp.sum(pos_term + neg_term)


if __name__ == "__main__":
    key = jax.random.PRNGKey(0)
    k_emb, k_adj, k_neg = jax.random.split(key, 3)

    N, D = 64, 32                                   # small synthetic graph
    X = jax.random.normal(k_emb, (1, N, D), dtype=jnp.float32) * 0.1
    A = (jax.random.uniform(k_adj, (N, N)) < 0.3).astype(jnp.float32)
    # guarantee every node has at least one neighbor (empty mean -> NaN in torch too)
    idx = jnp.arange(N)
    A = A.at[idx, (idx + 1) % N].set(1.0)
    A = A[None]                                     # (1, N, N)

    loss = unsupervised_loss(X, A, k_neg)
    jax.block_until_ready(loss)

    # cross-check kernel vs pure-JAX reference using identical masks
    Xs = jnp.squeeze(X, 0)
    As = jnp.squeeze(A, 0)
    pos_mask, neg_mask = _build_masks(As, k_neg, k=20)
    ref = _reference_loss(Xs, pos_mask, neg_mask)

    assert jnp.isfinite(loss), "loss is not finite"
    assert jnp.allclose(loss, ref, rtol=1e-5, atol=1e-5), (loss, ref)
    print("KERNEL_OK")
</pallas_src>

<mosaic_0001>
module attributes {stable_mosaic.version = 11 : i64} {
  func.func @_unsup_loss_kernel(%arg0: i32, %arg1: memref<128x128xf32, #tpu.memory_space<vmem>>, %arg2: memref<128x128xf32, #tpu.memory_space<vmem>>, %arg3: memref<128x128xi8, #tpu.memory_space<vmem>>, %arg4: memref<128x1xf32, #tpu.memory_space<vmem>>, %arg5: memref<128x1xf32, #tpu.memory_space<vmem>>, %arg6: memref<1x1xf32, #tpu.memory_space<smem>>) attributes {dimension_semantics = [#tpu.dimension_semantics<parallel>], iteration_bounds = array<i64: 1>, scalar_prefetch = 0 : i64, scratch_operands = 0 : i64, tpu.core_type = #tpu.core_type<tc>, window_params = [{transform_indices = @transform_0, window_bounds = array<i64: 128, 128>}, {pipeline_mode = #tpu.pipeline_mode<synchronous>, transform_indices = @transform_1, window_bounds = array<i64: 128, 128>}, {transform_indices = @transform_2, window_bounds = array<i64: 128, 128>}, {transform_indices = @transform_3, window_bounds = array<i64: 128, 1>}, {transform_indices = @transform_4, window_bounds = array<i64: 128, 1>}, {transform_indices = @transform_5, window_bounds = array<i64: 1, 1>}]} {
    %c0 = arith.constant 0 : index
    %c0_0 = arith.constant 0 : index
    %0 = vector.load %arg1[%c0, %c0_0] : memref<128x128xf32, #tpu.memory_space<vmem>>, vector<128x128xf32>
    %c0_1 = arith.constant 0 : index
    %c0_2 = arith.constant 0 : index
    %1 = vector.load %arg2[%c0_1, %c0_2] : memref<128x128xf32, #tpu.memory_space<vmem>>, vector<128x128xf32>
    %c0_3 = arith.constant 0 : index
    %c0_4 = arith.constant 0 : index
    %2 = vector.load %arg3[%c0_3, %c0_4] : memref<128x128xi8, #tpu.memory_space<vmem>>, vector<128x128xi8>
    %3 = arith.sitofp %2 : vector<128x128xi8> to vector<128x128xf32>
    %c0_5 = arith.constant 0 : index
    %c0_6 = arith.constant 0 : index
    %4 = vector.load %arg4[%c0_5, %c0_6] : memref<128x1xf32, #tpu.memory_space<vmem>>, vector<128x1xf32>
    %c0_7 = arith.constant 0 : index
    %c0_8 = arith.constant 0 : index
    %5 = vector.load %arg5[%c0_7, %c0_8] : memref<128x1xf32, #tpu.memory_space<vmem>>, vector<128x1xf32>
    %cst = arith.constant dense<0.000000e+00> : vector<128x128xf32>
    %6 = tpu.matmul %0, %1, %cst {dimension_numbers = #tpu.dot_dimension_numbers<[1], [0], [0], [1], [0, 0, 1, 1], [], []>} : vector<128x128xf32>, vector<128x128xf32>, vector<128x128xf32> -> vector<128x128xf32>
    %cst_9 = arith.constant 0.000000e+00 : f32
    %7 = vector.broadcast %cst_9 : f32 to vector<128x128xf32>
    %8 = arith.subf %7, %6 : vector<128x128xf32>
    %cst_10 = arith.constant 0.000000e+00 : f32
    %9 = vector.broadcast %cst_10 : f32 to vector<128x128xf32>
    %10 = arith.maximumf %8, %9 : vector<128x128xf32>
    %11 = math.absf %6 : vector<128x128xf32>
    %cst_11 = arith.constant 0.000000e+00 : f32
    %12 = vector.broadcast %cst_11 : f32 to vector<128x128xf32>
    %13 = arith.subf %12, %11 : vector<128x128xf32>
    %14 = math.exp %13 : vector<128x128xf32>
    %15 = math.log1p %14 : vector<128x128xf32>
    %16 = arith.addf %10, %15 : vector<128x128xf32>
    %cst_12 = arith.constant 0.000000e+00 : f32
    %17 = vector.broadcast %cst_12 : f32 to vector<128x128xf32>
    %18 = arith.subf %17, %16 : vector<128x128xf32>
    %cst_13 = arith.constant 1.000000e+00 : f32
    %19 = vector.broadcast %cst_13 : f32 to vector<128x128xf32>
    %20 = arith.cmpf oeq, %3, %19 : vector<128x128xf32>
    %21 = arith.extui %20 : vector<128x128xi1> to vector<128x128xi32>
    %22 = arith.sitofp %21 : vector<128x128xi32> to vector<128x128xf32>
    %cst_14 = arith.constant 2.000000e+00 : f32
    %23 = vector.broadcast %cst_14 : f32 to vector<128x128xf32>
    %24 = arith.cmpf oeq, %3, %23 : vector<128x128xf32>
    %25 = arith.extui %24 : vector<128x128xi1> to vector<128x128xi32>
    %26 = arith.sitofp %25 : vector<128x128xi32> to vector<128x128xf32>
    %27 = vector.broadcast %4 : vector<128x1xf32> to vector<128x128xf32>
    %28 = arith.mulf %22, %27 : vector<128x128xf32>
    %29 = vector.broadcast %5 : vector<128x1xf32> to vector<128x128xf32>
    %30 = arith.mulf %26, %29 : vector<128x128xf32>
    %31 = arith.mulf %30, %6 : vector<128x128xf32>
    %32 = arith.addf %28, %30 : vector<128x128xf32>
    %33 = arith.mulf %32, %18 : vector<128x128xf32>
    %34 = arith.subf %31, %33 : vector<128x128xf32>
    %35 = vector.shape_cast %34 : vector<128x128xf32> to vector<1x128x128xf32>
    %cst_15 = arith.constant dense<0.000000e+00> : vector<1xf32>
    %36 = vector.multi_reduction <add>, %35, %cst_15 [1, 2] : vector<1x128x128xf32> to vector<1xf32>
    %37 = vector.shape_cast %36 : vector<1xf32> to vector<1x1x1xf32>
    %38 = vector.extract %37[0, 0, 0] : f32 from vector<1x1x1xf32>
    %c0_16 = arith.constant 0 : index
    %c0_17 = arith.constant 0 : index
    %39 = memref.load %arg6[%c0_16, %c0_17] : memref<1x1xf32, #tpu.memory_space<smem>>
    memref.store %38, %arg6[%c0_16, %c0_17] : memref<1x1xf32, #tpu.memory_space<smem>>
    return
  }
  func.func @transform_0(%arg0: i32) -> (i32, i32) {
    %c0_i32 = arith.constant 0 : i32
    %c0_i32_0 = arith.constant 0 : i32
    return %arg0, %c0_i32 : i32, i32
  }
  func.func @transform_1(%arg0: i32) -> (i32, i32) {
    %c0_i32 = arith.constant 0 : i32
    %c0_i32_0 = arith.constant 0 : i32
    %c0_i32_1 = arith.constant 0 : i32
    return %c0_i32, %c0_i32_0 : i32, i32
  }
  func.func @transform_2(%arg0: i32) -> (i32, i32) {
    %c0_i32 = arith.constant 0 : i32
    %c0_i32_0 = arith.constant 0 : i32
    return %arg0, %c0_i32 : i32, i32
  }
  func.func @transform_3(%arg0: i32) -> (i32, i32) {
    %c0_i32 = arith.constant 0 : i32
    %c0_i32_0 = arith.constant 0 : i32
    return %arg0, %c0_i32 : i32, i32
  }
  func.func @transform_4(%arg0: i32) -> (i32, i32) {
    %c0_i32 = arith.constant 0 : i32
    %c0_i32_0 = arith.constant 0 : i32
    return %arg0, %c0_i32 : i32, i32
  }
  func.func @transform_5(%arg0: i32) -> (i32, i32) {
    %c0_i32 = arith.constant 0 : i32
    %c0_i32_0 = arith.constant 0 : i32
    return %arg0, %c0_i32 : i32, i32
  }
}

</mosaic_0001>

<llo_original>
// kernel: unsupervised_loss.1
$region0: #{unsupervised_loss.1}
  #allocation0 [shape = 'u32[]', space=smem, size = 0x4, offset = 0x4, fixed_abs, tag = 'smem constant byte address 0x4 - core index']
  #allocation1 [shape = 'u32[144,128]{1,0:T(1,128)}', space=vmem, size = 0x12000, scoped, tag = 'internal scratch']
  %s0 = inlined_call_operand.vmem [shape: f32[128,128], index: 0, kind: input, shape index: {}]
  %s1 = inlined_call_operand.vmem [shape: f32[128,128], index: 1, kind: input, shape index: {}]
  %s2 = inlined_call_operand.vmem [shape: s8[128,128], index: 2, kind: input, shape index: {}]
  %s3 = inlined_call_operand.vmem [shape: f32[128,1], index: 3, kind: input, shape index: {}]
  %s4 = inlined_call_operand.vmem [shape: f32[128,1], index: 4, kind: input, shape index: {}]
  %s5 = inlined_call_operand.hbm [shape: f32[1,1], index: 5, kind: output, shape index: {}]
  %s6 = sld [smem:[#allocation0]]
  $region30: #{unsupervised_loss.1} parent=0
    _
  %s8 = ssub.s32 1, %s6
  %s9 = scalar_select 0, %s8, %s6
  $region1: #{unsupervised_loss.1} parent=0
    #allocation2 [shape = 'u8[512]{0}', space=smem, size = 0x200, scoped, tag = 'output window, operand 0, single buffered']
    #allocation3 [shape = 's32[1]{0}', space=sflag, size = 0x4, scoped, tag = 'scoped memory for unsupervised_loss.1']
    %10 = vsyncpa [#allocation3], 0
    // Predicated region
    $region2: #{unsupervised_loss.1} parent=1 // pred_check
      _
    $region3: #{unsupervised_loss.1} parent=1 // pred_check_branch
      %12 = sbr.rel (0) target = $region5
    $region4: #{unsupervised_loss.1} parent=1 // pred_region
      _
    $region5: #{unsupervised_loss.1} parent=1 // pred_fallthru
      _
    // Predicated region
    $region6: #{unsupervised_loss.1} parent=1 // pred_check
      _
    $region7: #{unsupervised_loss.1} parent=1 // pred_check_branch
      %14 = sbr.rel (0) target = $region9
    $region8: #{unsupervised_loss.1} parent=1 // pred_region
      _
    $region9: #{unsupervised_loss.1} parent=1 // pred_fallthru
      _
    // Predicated region
    $region10: #{unsupervised_loss.1} parent=1 // pred_check
      _
    $region11: #{unsupervised_loss.1} parent=1 // pred_check_branch
      %16 = sbr.rel (0) target = $region13
    $region12: #{unsupervised_loss.1} parent=1 // pred_region
      _
    $region13: #{unsupervised_loss.1} parent=1 // pred_fallthru
      _
    // Predicated region
    $region14: #{unsupervised_loss.1} parent=1 // pred_check
      _
    $region15: #{unsupervised_loss.1} parent=1 // pred_check_branch
      %18 = sbr.rel (0) target = $region17
    $region16: #{unsupervised_loss.1} parent=1 // pred_region
      _
    $region17: #{unsupervised_loss.1} parent=1 // pred_fallthru
      _
    // Predicated region
    $region18: #{unsupervised_loss.1} parent=1 // pred_check
      _
    $region19: #{unsupervised_loss.1} parent=1 // pred_check_branch
      %20 = sbr.rel (0) target = $region21
    $region20: #{unsupervised_loss.1} parent=1 // pred_region
      _
    $region21: #{unsupervised_loss.1} parent=1 // pred_fallthru
      _
    %v21 = vld [vmem:[%s0] sm:$0xff]
    %v22 = vld [vmem:[%s0 + $0x8] sm:$0xff]
    %v23 = vld [vmem:[%s0 + $0x10] sm:$0xff]
    %v24 = vld [vmem:[%s0 + $0x18] sm:$0xff]
    %v25 = vld [vmem:[%s0 + $0x20] sm:$0xff]
    %v26 = vld [vmem:[%s0 + $0x28] sm:$0xff]
    %v27 = vld [vmem:[%s0 + $0x30] sm:$0xff]
    %v28 = vld [vmem:[%s0 + $0x38] sm:$0xff]
    %v29 = vld [vmem:[%s0 + $0x40] sm:$0xff]
    %v30 = vld [vmem:[%s0 + $0x48] sm:$0xff]
    %v31 = vld [vmem:[%s0 + $0x50] sm:$0xff]
    %v32 = vld [vmem:[%s0 + $0x58] sm:$0xff]
    %v33 = vld [vmem:[%s0 + $0x60] sm:$0xff]
    %v34 = vld [vmem:[%s0 + $0x68] sm:$0xff]
    %v35 = vld [vmem:[%s0 + $0x70] sm:$0xff]
    %v36 = vld [vmem:[%s0 + $0x78] sm:$0xff]
    %v37 = vld [vmem:[%s1] sm:$0xff]
    %v38 = vld [vmem:[%s1 + $0x8] sm:$0xff]
    %v39 = vld [vmem:[%s1 + $0x10] sm:$0xff]
    %v40 = vld [vmem:[%s1 + $0x18] sm:$0xff]
    %v41 = vld [vmem:[%s1 + $0x20] sm:$0xff]
    %v42 = vld [vmem:[%s1 + $0x28] sm:$0xff]
    %v43 = vld [vmem:[%s1 + $0x30] sm:$0xff]
    %v44 = vld [vmem:[%s1 + $0x38] sm:$0xff]
    %v45 = vld [vmem:[%s1 + $0x40] sm:$0xff]
    %v46 = vld [vmem:[%s1 + $0x48] sm:$0xff]
    %v47 = vld [vmem:[%s1 + $0x50] sm:$0xff]
    %v48 = vld [vmem:[%s1 + $0x58] sm:$0xff]
    %v49 = vld [vmem:[%s1 + $0x60] sm:$0xff]
    %v50 = vld [vmem:[%s1 + $0x68] sm:$0xff]
    %v51 = vld [vmem:[%s1 + $0x70] sm:$0xff]
    %v52 = vld [vmem:[%s1 + $0x78] sm:$0xff]
    %v53 = vld [vmem:[%s2] sm:$0xff]
    %v54 = vld [vmem:[%s2 + $0x8] sm:$0xff]
    %v55 = vld [vmem:[%s2 + $0x10] sm:$0xff]
    %v56 = vld [vmem:[%s2 + $0x18] sm:$0xff]
    %v57 = vunpack.c.0.s8 %v53
    %v58 = vunpack.c.1.s8 %v53
    %v59 = vunpack.c.2.s8 %v53
    %v60 = vunpack.c.3.s8 %v53
    %v61 = vunpack.c.0.s8 %v54
    %v62 = vunpack.c.1.s8 %v54
    %v63 = vunpack.c.2.s8 %v54
    %v64 = vunpack.c.3.s8 %v54
    %v65 = vunpack.c.0.s8 %v55
    %v66 = vunpack.c.1.s8 %v55
    %v67 = vunpack.c.2.s8 %v55
    %v68 = vunpack.c.3.s8 %v55
    %v69 = vunpack.c.0.s8 %v56
    %v70 = vunpack.c.1.s8 %v56
    %v71 = vunpack.c.2.s8 %v56
    %v72 = vunpack.c.3.s8 %v56
    %v73 = vcvt.s32.f32 %v57
    %v74 = vcvt.s32.f32 %v58
    %v75 = vcvt.s32.f32 %v59
    %v76 = vcvt.s32.f32 %v60
    %v77 = vcvt.s32.f32 %v61
    %v78 = vcvt.s32.f32 %v62
    %v79 = vcvt.s32.f32 %v63
    %v80 = vcvt.s32.f32 %v64
    %v81 = vcvt.s32.f32 %v65
    %v82 = vcvt.s32.f32 %v66
    %v83 = vcvt.s32.f32 %v67
    %v84 = vcvt.s32.f32 %v68
    %v85 = vcvt.s32.f32 %v69
    %v86 = vcvt.s32.f32 %v70
    %v87 = vcvt.s32.f32 %v71
    %v88 = vcvt.s32.f32 %v72
    %v89 = vld [vmem:[%s3] sm:$0xff]
    %v90 = vld [vmem:[%s3 + $0x8] sm:$0xff]
    %v91 = vld [vmem:[%s3 + $0x10] sm:$0xff]
    %v92 = vld [vmem:[%s3 + $0x18] sm:$0xff]
    %v93 = vld [vmem:[%s3 + $0x20] sm:$0xff]
    %v94 = vld [vmem:[%s3 + $0x28] sm:$0xff]
    %v95 = vld [vmem:[%s3 + $0x30] sm:$0xff]
    %v96 = vld [vmem:[%s3 + $0x38] sm:$0xff]
    %v97 = vld [vmem:[%s3 + $0x40] sm:$0xff]
    %v98 = vld [vmem:[%s3 + $0x48] sm:$0xff]
    %v99 = vld [vmem:[%s3 + $0x50] sm:$0xff]
    %v100 = vld [vmem:[%s3 + $0x58] sm:$0xff]
    %v101 = vld [vmem:[%s3 + $0x60] sm:$0xff]
    %v102 = vld [vmem:[%s3 + $0x68] sm:$0xff]
    %v103 = vld [vmem:[%s3 + $0x70] sm:$0xff]
    %v104 = vld [vmem:[%s3 + $0x78] sm:$0xff]
    %v105 = vld [vmem:[%s4] sm:$0xff]
    %v106 = vld [vmem:[%s4 + $0x8] sm:$0xff]
    %v107 = vld [vmem:[%s4 + $0x10] sm:$0xff]
    %v108 = vld [vmem:[%s4 + $0x18] sm:$0xff]
    %v109 = vld [vmem:[%s4 + $0x20] sm:$0xff]
    %v110 = vld [vmem:[%s4 + $0x28] sm:$0xff]
    %v111 = vld [vmem:[%s4 + $0x30] sm:$0xff]
    %v112 = vld [vmem:[%s4 + $0x38] sm:$0xff]
    %v113 = vld [vmem:[%s4 + $0x40] sm:$0xff]
    %v114 = vld [vmem:[%s4 + $0x48] sm:$0xff]
    %v115 = vld [vmem:[%s4 + $0x50] sm:$0xff]
    %v116 = vld [vmem:[%s4 + $0x58] sm:$0xff]
    %v117 = vld [vmem:[%s4 + $0x60] sm:$0xff]
    %v118 = vld [vmem:[%s4 + $0x68] sm:$0xff]
    %v119 = vld [vmem:[%s4 + $0x70] sm:$0xff]
    %v120 = vld [vmem:[%s4 + $0x78] sm:$0xff]
    %121 = vmatprep.subr.mxu0 0.0
    %122 = vmatpush1.msra.mxu0 %v52
    %123 = vmatprep.subr.mxu0 0.0
    %124 = vmatpush1.msra.mxu0 %v51
    %125 = vmatprep.subr.mxu0 0.0
    %126 = vmatpush1.msra.mxu0 %v50
    %127 = vmatprep.subr.mxu0 0.0
    %128 = vmatpush1.msra.mxu0 %v49
    %129 = vmatprep.subr.mxu0 0.0
    %130 = vmatpush1.msra.mxu0 %v48
    %131 = vmatprep.subr.mxu0 0.0
    %132 = vmatpush1.msra.mxu0 %v47
    %133 = vmatprep.subr.mxu0 0.0
    %134 = vmatpush1.msra.mxu0 %v46
    %135 = vmatprep.subr.mxu0 0.0
    %136 = vmatpush1.msra.mxu0 %v45
    %137 = vmatprep.subr.mxu0 0.0
    %138 = vmatpush1.msra.mxu0 %v44
    %139 = vmatprep.subr.mxu0 0.0
    %140 = vmatpush1.msra.mxu0 %v43
    %141 = vmatprep.subr.mxu0 0.0
    %142 = vmatpush1.msra.mxu0 %v42
    %143 = vmatprep.subr.mxu0 0.0
    %144 = vmatpush1.msra.mxu0 %v41
    %145 = vmatprep.subr.mxu0 0.0
    %146 = vmatpush1.msra.mxu0 %v40
    %147 = vmatprep.subr.mxu0 0.0
    %148 = vmatpush1.msra.mxu0 %v39
    %149 = vmatprep.subr.mxu0 0.0
    %150 = vmatpush1.msra.mxu0 %v38
    %151 = vmatprep.subr.mxu0 0.0
    %152 = vmatpush1.msra.mxu0 %v37
    %153 = vmatprep.subr.mxu0 0.0
    %154 = vmatpush2.msra.mxu0 0.0
    %155 = vmatprep.subr.mxu0 0.0
    %156 = vmatpush2.msra.mxu0 0.0
    %157 = vmatprep.subr.mxu0 0.0
    %158 = vmatpush2.msra.mxu0 0.0
    %159 = vmatprep.subr.mxu0 0.0
    %160 = vmatpush2.msra.mxu0 0.0
    %161 = vmatprep.subr.mxu0 0.0
    %162 = vmatpush2.msra.mxu0 0.0
    %163 = vmatprep.subr.mxu0 0.0
    %164 = vmatpush2.msra.mxu0 0.0
    %165 = vmatprep.subr.mxu0 0.0
    %166 = vmatpush2.msra.mxu0 0.0
    %167 = vmatprep.subr.mxu0 0.0
    %168 = vmatpush2.msra.mxu0 0.0
    %169 = vmatprep.subr.mxu0 0.0
    %170 = vmatpush2.msra.mxu0 0.0
    %171 = vmatprep.subr.mxu0 0.0
    %172 = vmatpush2.msra.mxu0 0.0
    %173 = vmatprep.subr.mxu0 0.0
    %174 = vmatpush2.msra.mxu0 0.0
    %175 = vmatprep.subr.mxu0 0.0
    %176 = vmatpush2.msra.mxu0 0.0
    %177 = vmatprep.subr.mxu0 0.0
    %178 = vmatpush2.msra.mxu0 0.0
    %179 = vmatprep.subr.mxu0 0.0
    %180 = vmatpush2.msra.mxu0 0.0
    %181 = vmatprep.subr.mxu0 0.0
    %182 = vmatpush2.msra.mxu0 0.0
    %183 = vmatprep.subr.mxu0 0.0
    %184 = vmatpush2.msra.mxu0 0.0
    %185 = vmatprep.mubr.f32.mxu0 0.0
    %186 = vmatmul.mubr.f32.gmra.mxu0 %v21
    %v187 = vpop.f32.mrf.mxu0
    %v188 = vadd.f32 0.0, %v187
    %v189 = vpop.f32.mrf.mxu0
    %190 = vmatprep.mubr.f32.mxu0 0.0
    %191 = vmatmul.mubr.f32.gmra.mxu0 %v22
    %v192 = vpop.f32.mrf.mxu0
    %v193 = vadd.f32 0.0, %v192
    %v194 = vpop.f32.mrf.mxu0
    %195 = vmatprep.mubr.f32.mxu0 0.0
    %196 = vmatmul.mubr.f32.gmra.mxu0 %v23
    %v197 = vpop.f32.mrf.mxu0
    %v198 = vadd.f32 0.0, %v197
    %v199 = vpop.f32.mrf.mxu0
    %200 = vmatprep.mubr.f32.mxu0 0.0
    %201 = vmatmul.mubr.f32.gmra.mxu0 %v24
    %v202 = vpop.f32.mrf.mxu0
    %v203 = vadd.f32 0.0, %v202
    %v204 = vpop.f32.mrf.mxu0
    %205 = vmatprep.mubr.f32.mxu0 0.0
    %206 = vmatmul.mubr.f32.gmra.mxu0 %v25
    %v207 = vpop.f32.mrf.mxu0
    %v208 = vadd.f32 0.0, %v207
    %v209 = vpop.f32.mrf.mxu0
    %210 = vmatprep.mubr.f32.mxu0 0.0
    %211 = vmatmul.mubr.f32.gmra.mxu0 %v26
    %v212 = vpop.f32.mrf.mxu0
    %v213 = vadd.f32 0.0, %v212
    %v214 = vpop.f32.mrf.mxu0
    %215 = vmatprep.mubr.f32.mxu0 0.0
    %216 = vmatmul.mubr.f32.gmra.mxu0 %v27
    %v217 = vpop.f32.mrf.mxu0
    %v218 = vadd.f32 0.0, %v217
    %v219 = vpop.f32.mrf.mxu0
    %220 = vmatprep.mubr.f32.mxu0 0.0
    %221 = vmatmul.mubr.f32.gmra.mxu0 %v28
    %v222 = vpop.f32.mrf.mxu0
    %v223 = vadd.f32 0.0, %v222
    %v224 = vpop.f32.mrf.mxu0
    %225 = vmatprep.mubr.f32.mxu0 0.0
    %226 = vmatmul.mubr.f32.gmra.mxu0 %v29
    %v227 = vpop.f32.mrf.mxu0
    %v228 = vadd.f32 0.0, %v227
    %v229 = vpop.f32.mrf.mxu0
    %230 = vmatprep.mubr.f32.mxu0 0.0
    %231 = vmatmul.mubr.f32.gmra.mxu0 %v30
    %v232 = vpop.f32.mrf.mxu0
    %v233 = vadd.f32 0.0, %v232
    %v234 = vpop.f32.mrf.mxu0
    %235 = vmatprep.mubr.f32.mxu0 0.0
    %236 = vmatmul.mubr.f32.gmra.mxu0 %v31
    %v237 = vpop.f32.mrf.mxu0
    %v238 = vadd.f32 0.0, %v237
    %v239 = vpop.f32.mrf.mxu0
    %240 = vmatprep.mubr.f32.mxu0 0.0
    %241 = vmatmul.mubr.f32.gmra.mxu0 %v32
    %v242 = vpop.f32.mrf.mxu0
    %v243 = vadd.f32 0.0, %v242
    %v244 = vpop.f32.mrf.mxu0
    %245 = vmatprep.mubr.f32.mxu0 0.0
    %246 = vmatmul.mubr.f32.gmra.mxu0 %v33
    %v247 = vpop.f32.mrf.mxu0
    %v248 = vadd.f32 0.0, %v247
    %v249 = vpop.f32.mrf.mxu0
    %250 = vmatprep.mubr.f32.mxu0 0.0
    %251 = vmatmul.mubr.f32.gmra.mxu0 %v34
    %v252 = vpop.f32.mrf.mxu0
    %v253 = vadd.f32 0.0, %v252
    %v254 = vpop.f32.mrf.mxu0
    %255 = vmatprep.mubr.f32.mxu0 0.0
    %256 = vmatmul.mubr.f32.gmra.mxu0 %v35
    %v257 = vpop.f32.mrf.mxu0
    %v258 = vadd.f32 0.0, %v257
    %v259 = vpop.f32.mrf.mxu0
    %260 = vmatprep.mubr.f32.mxu0 0.0
    %261 = vmatmul.mubr.f32.gmra.mxu0 %v36
    %v262 = vpop.f32.mrf.mxu0
    %v263 = vadd.f32 0.0, %v262
    %v264 = vpop.f32.mrf.mxu0
    %265 = vdwg.mxu0
    %v266 = vsub.f32 0.0, %v188
    %v267 = vsub.f32 0.0, %v193
    %v268 = vsub.f32 0.0, %v198
    %v269 = vsub.f32 0.0, %v203
    %v270 = vsub.f32 0.0, %v208
    %v271 = vsub.f32 0.0, %v213
    %v272 = vsub.f32 0.0, %v218
    %v273 = vsub.f32 0.0, %v223
    %v274 = vsub.f32 0.0, %v228
    %v275 = vsub.f32 0.0, %v233
    %v276 = vsub.f32 0.0, %v238
    %v277 = vsub.f32 0.0, %v243
    %v278 = vsub.f32 0.0, %v248
    %v279 = vsub.f32 0.0, %v253
    %v280 = vsub.f32 0.0, %v258
    %v281 = vsub.f32 0.0, %v263
    %v282 = vmax.f32 %v266, 0.0
    %v283 = vmax.f32 %v267, 0.0
    %v284 = vmax.f32 %v268, 0.0
    %v285 = vmax.f32 %v269, 0.0
    %v286 = vmax.f32 %v270, 0.0
    %v287 = vmax.f32 %v271, 0.0
    %v288 = vmax.f32 %v272, 0.0
    %v289 = vmax.f32 %v273, 0.0
    %v290 = vmax.f32 %v274, 0.0
    %v291 = vmax.f32 %v275, 0.0
    %v292 = vmax.f32 %v276, 0.0
    %v293 = vmax.f32 %v277, 0.0
    %v294 = vmax.f32 %v278, 0.0
    %v295 = vmax.f32 %v279, 0.0
    %v296 = vmax.f32 %v280, 0.0
    %v297 = vmax.f32 %v281, 0.0
    %v298 = vand.u32 2147483647, %v188
    %v299 = vand.u32 2147483647, %v193
    %v300 = vand.u32 2147483647, %v198
    %v301 = vand.u32 2147483647, %v203
    %v302 = vand.u32 2147483647, %v208
    %v303 = vand.u32 2147483647, %v213
    %v304 = vand.u32 2147483647, %v218
    %v305 = vand.u32 2147483647, %v223
    %v306 = vand.u32 2147483647, %v228
    %v307 = vand.u32 2147483647, %v233
    %v308 = vand.u32 2147483647, %v238
    %v309 = vand.u32 2147483647, %v243
    %v310 = vand.u32 2147483647, %v248
    %v311 = vand.u32 2147483647, %v253
    %v312 = vand.u32 2147483647, %v258
    %v313 = vand.u32 2147483647, %v263
    %v314 = vsub.f32 0.0, %v298
    %v315 = vsub.f32 0.0, %v299
    %v316 = vsub.f32 0.0, %v300
    %v317 = vsub.f32 0.0, %v301
    %v318 = vsub.f32 0.0, %v302
    %v319 = vsub.f32 0.0, %v303
    %v320 = vsub.f32 0.0, %v304
    %v321 = vsub.f32 0.0, %v305
    %v322 = vsub.f32 0.0, %v306
    %v323 = vsub.f32 0.0, %v307
    %v324 = vsub.f32 0.0, %v308
    %v325 = vsub.f32 0.0, %v309
    %v326 = vsub.f32 0.0, %v310
    %v327 = vsub.f32 0.0, %v311
    %v328 = vsub.f32 0.0, %v312
    %v329 = vsub.f32 0.0, %v313
    %v330 = vmul.f32 %v314, 1.442695
    %v331 = vpow.pop %v330
    %v332 = vmul.f32 %v315, 1.442695
    %v333 = vpow.pop %v332
    %v334 = vmul.f32 %v316, 1.442695
    %v335 = vpow.pop %v334
    %v336 = vmul.f32 %v317, 1.442695
    %v337 = vpow.pop %v336
    %v338 = vmul.f32 %v318, 1.442695
    %v339 = vpow.pop %v338
    %v340 = vmul.f32 %v319, 1.442695
    %v341 = vpow.pop %v340
    %v342 = vmul.f32 %v320, 1.442695
    %v343 = vpow.pop %v342
    %v344 = vmul.f32 %v321, 1.442695
    %v345 = vpow.pop %v344
    %v346 = vmul.f32 %v322, 1.442695
    %v347 = vpow.pop %v346
    %v348 = vmul.f32 %v323, 1.442695
    %v349 = vpow.pop %v348
    %v350 = vmul.f32 %v324, 1.442695
    %v351 = vpow.pop %v350
    %v352 = vmul.f32 %v325, 1.442695
    %v353 = vpow.pop %v352
    %v354 = vmul.f32 %v326, 1.442695
    %v355 = vpow.pop %v354
    %v356 = vmul.f32 %v327, 1.442695
    %v357 = vpow.pop %v356
    %v358 = vmul.f32 %v328, 1.442695
    %v359 = vpow.pop %v358
    %v360 = vmul.f32 %v329, 1.442695
    %v361 = vpow.pop %v360
    %v362 = vadd.f32 %v331, 1.0
    %v363 = vlog2.pop %v362
    %v364 = vmul.f32 %v363, 0.6931472
    %v365 = vmul.f32 -0.5, %v331
    %v366 = vadd.f32 %v365, 1.0
    %v367 = vmul.f32 %v366, %v331
    %v368 = vand.u32 2147483647, %v331
    %vm369 = vcmp.lt.f32.partialorder %v368, 0.0004427343
    %v370 = vsel %vm369, %v367, %v364
    %v371 = vadd.f32 %v333, 1.0
    %v372 = vlog2.pop %v371
    %v373 = vmul.f32 %v372, 0.6931472
    %v374 = vmul.f32 -0.5, %v333
    %v375 = vadd.f32 %v374, 1.0
    %v376 = vmul.f32 %v375, %v333
    %v377 = vand.u32 2147483647, %v333
    %vm378 = vcmp.lt.f32.partialorder %v377, 0.0004427343
    %v379 = vsel %vm378, %v376, %v373
    %v380 = vadd.f32 %v335, 1.0
    %v381 = vlog2.pop %v380
    %v382 = vmul.f32 %v381, 0.6931472
    %v383 = vmul.f32 -0.5, %v335
    %v384 = vadd.f32 %v383, 1.0
    %v385 = vmul.f32 %v384, %v335
    %v386 = vand.u32 2147483647, %v335
    %vm387 = vcmp.lt.f32.partialorder %v386, 0.0004427343
    %v388 = vsel %vm387, %v385, %v382
    %v389 = vadd.f32 %v337, 1.0
    %v390 = vlog2.pop %v389
    %v391 = vmul.f32 %v390, 0.6931472
    %v392 = vmul.f32 -0.5, %v337
    %v393 = vadd.f32 %v392, 1.0
    %v394 = vmul.f32 %v393, %v337
    %v395 = vand.u32 2147483647, %v337
    %vm396 = vcmp.lt.f32.partialorder %v395, 0.0004427343
    %v397 = vsel %vm396, %v394, %v391
    %v398 = vadd.f32 %v339, 1.0
    %v399 = vlog2.pop %v398
    %v400 = vmul.f32 %v399, 0.6931472
    %v401 = vmul.f32 -0.5, %v339
    %v402 = vadd.f32 %v401, 1.0
    %v403 = vmul.f32 %v402, %v339
    %v404 = vand.u32 2147483647, %v339
    %vm405 = vcmp.lt.f32.partialorder %v404, 0.0004427343
    %v406 = vsel %vm405, %v403, %v400
    %v407 = vadd.f32 %v341, 1.0
    %v408 = vlog2.pop %v407
    %v409 = vmul.f32 %v408, 0.6931472
    %v410 = vmul.f32 -0.5, %v341
    %v411 = vadd.f32 %v410, 1.0
    %v412 = vmul.f32 %v411, %v341
    %v413 = vand.u32 2147483647, %v341
    %vm414 = vcmp.lt.f32.partialorder %v413, 0.0004427343
    %v415 = vsel %vm414, %v412, %v409
    %v416 = vadd.f32 %v343, 1.0
    %v417 = vlog2.pop %v416
    %v418 = vmul.f32 %v417, 0.6931472
    %v419 = vmul.f32 -0.5, %v343
    %v420 = vadd.f32 %v419, 1.0
    %v421 = vmul.f32 %v420, %v343
    %v422 = vand.u32 2147483647, %v343
    %vm423 = vcmp.lt.f32.partialorder %v422, 0.0004427343
    %v424 = vsel %vm423, %v421, %v418
    %v425 = vadd.f32 %v345, 1.0
    %v426 = vlog2.pop %v425
    %v427 = vmul.f32 %v426, 0.6931472
    %v428 = vmul.f32 -0.5, %v345
    %v429 = vadd.f32 %v428, 1.0
    %v430 = vmul.f32 %v429, %v345
    %v431 = vand.u32 2147483647, %v345
    %vm432 = vcmp.lt.f32.partialorder %v431, 0.0004427343
    %v433 = vsel %vm432, %v430, %v427
    %v434 = vadd.f32 %v347, 1.0
    %v435 = vlog2.pop %v434
    %v436 = vmul.f32 %v435, 0.6931472
    %v437 = vmul.f32 -0.5, %v347
    %v438 = vadd.f32 %v437, 1.0
    %v439 = vmul.f32 %v438, %v347
    %v440 = vand.u32 2147483647, %v347
    %vm441 = vcmp.lt.f32.partialorder %v440, 0.0004427343
    %v442 = vsel %vm441, %v439, %v436
    %v443 = vadd.f32 %v349, 1.0
    %v444 = vlog2.pop %v443
    %v445 = vmul.f32 %v444, 0.6931472
    %v446 = vmul.f32 -0.5, %v349
    %v447 = vadd.f32 %v446, 1.0
    %v448 = vmul.f32 %v447, %v349
    %v449 = vand.u32 2147483647, %v349
    %vm450 = vcmp.lt.f32.partialorder %v449, 0.0004427343
    %v451 = vsel %vm450, %v448, %v445
    %v452 = vadd.f32 %v351, 1.0
    %v453 = vlog2.pop %v452
    %v454 = vmul.f32 %v453, 0.6931472
    %v455 = vmul.f32 -0.5, %v351
    %v456 = vadd.f32 %v455, 1.0
    %v457 = vmul.f32 %v456, %v351
    %v458 = vand.u32 2147483647, %v351
    %vm459 = vcmp.lt.f32.partialorder %v458, 0.0004427343
    %v460 = vsel %vm459, %v457, %v454
    %v461 = vadd.f32 %v353, 1.0
    %v462 = vlog2.pop %v461
    %v463 = vmul.f32 %v462, 0.6931472
    %v464 = vmul.f32 -0.5, %v353
    %v465 = vadd.f32 %v464, 1.0
    %v466 = vmul.f32 %v465, %v353
    %v467 = vand.u32 2147483647, %v353
    %vm468 = vcmp.lt.f32.partialorder %v467, 0.0004427343
    %v469 = vsel %vm468, %v466, %v463
    %v470 = vadd.f32 %v355, 1.0
    %v471 = vlog2.pop %v470
    %v472 = vmul.f32 %v471, 0.6931472
    %v473 = vmul.f32 -0.5, %v355
    %v474 = vadd.f32 %v473, 1.0
    %v475 = vmul.f32 %v474, %v355
    %v476 = vand.u32 2147483647, %v355
    %vm477 = vcmp.lt.f32.partialorder %v476, 0.0004427343
    %v478 = vsel %vm477, %v475, %v472
    %v479 = vadd.f32 %v357, 1.0
    %v480 = vlog2.pop %v479
    %v481 = vmul.f32 %v480, 0.6931472
    %v482 = vmul.f32 -0.5, %v357
    %v483 = vadd.f32 %v482, 1.0
    %v484 = vmul.f32 %v483, %v357
    %v485 = vand.u32 2147483647, %v357
    %vm486 = vcmp.lt.f32.partialorder %v485, 0.0004427343
    %v487 = vsel %vm486, %v484, %v481
    %v488 = vadd.f32 %v359, 1.0
    %v489 = vlog2.pop %v488
    %v490 = vmul.f32 %v489, 0.6931472
    %v491 = vmul.f32 -0.5, %v359
    %v492 = vadd.f32 %v491, 1.0
    %v493 = vmul.f32 %v492, %v359
    %v494 = vand.u32 2147483647, %v359
    %vm495 = vcmp.lt.f32.partialorder %v494, 0.0004427343
    %v496 = vsel %vm495, %v493, %v490
    %v497 = vadd.f32 %v361, 1.0
    %v498 = vlog2.pop %v497
    %v499 = vmul.f32 %v498, 0.6931472
    %v500 = vmul.f32 -0.5, %v361
    %v501 = vadd.f32 %v500, 1.0
    %v502 = vmul.f32 %v501, %v361
    %v503 = vand.u32 2147483647, %v361
    %vm504 = vcmp.lt.f32.partialorder %v503, 0.0004427343
    %v505 = vsel %vm504, %v502, %v499
    %v506 = vadd.f32 %v282, %v370
    %v507 = vadd.f32 %v283, %v379
    %v508 = vadd.f32 %v284, %v388
    %v509 = vadd.f32 %v285, %v397
    %v510 = vadd.f32 %v286, %v406
    %v511 = vadd.f32 %v287, %v415
    %v512 = vadd.f32 %v288, %v424
    %v513 = vadd.f32 %v289, %v433
    %v514 = vadd.f32 %v290, %v442
    %v515 = vadd.f32 %v291, %v451
    %v516 = vadd.f32 %v292, %v460
    %v517 = vadd.f32 %v293, %v469
    %v518 = vadd.f32 %v294, %v478
    %v519 = vadd.f32 %v295, %v487
    %v520 = vadd.f32 %v296, %v496
    %v521 = vadd.f32 %v297, %v505
    %v522 = vsub.f32 0.0, %v506
    %v523 = vsub.f32 0.0, %v507
    %v524 = vsub.f32 0.0, %v508
    %v525 = vsub.f32 0.0, %v509
    %v526 = vsub.f32 0.0, %v510
    %v527 = vsub.f32 0.0, %v511
    %v528 = vsub.f32 0.0, %v512
    %v529 = vsub.f32 0.0, %v513
    %v530 = vsub.f32 0.0, %v514
    %v531 = vsub.f32 0.0, %v515
    %v532 = vsub.f32 0.0, %v516
    %v533 = vsub.f32 0.0, %v517
    %v534 = vsub.f32 0.0, %v518
    %v535 = vsub.f32 0.0, %v519
    %v536 = vsub.f32 0.0, %v520
    %v537 = vsub.f32 0.0, %v521
    %vm538 = vcmp.eq.f32.partialorder %v73, 1.0
    %vm539 = vcmp.eq.f32.partialorder %v74, 1.0
    %vm540 = vcmp.eq.f32.partialorder %v75, 1.0
    %vm541 = vcmp.eq.f32.partialorder %v76, 1.0
    %vm542 = vcmp.eq.f32.partialorder %v77, 1.0
    %vm543 = vcmp.eq.f32.partialorder %v78, 1.0
    %vm544 = vcmp.eq.f32.partialorder %v79, 1.0
    %vm545 = vcmp.eq.f32.partialorder %v80, 1.0
    %vm546 = vcmp.eq.f32.partialorder %v81, 1.0
    %vm547 = vcmp.eq.f32.partialorder %v82, 1.0
    %vm548 = vcmp.eq.f32.partialorder %v83, 1.0
    %vm549 = vcmp.eq.f32.partialorder %v84, 1.0
    %vm550 = vcmp.eq.f32.partialorder %v85, 1.0
    %vm551 = vcmp.eq.f32.partialorder %v86, 1.0
    %vm552 = vcmp.eq.f32.partialorder %v87, 1.0
    %vm553 = vcmp.eq.f32.partialorder %v88, 1.0
    %v554 = vsel %vm538, 1, 0
    %v555 = vsel %vm539, 1, 0
    %v556 = vsel %vm540, 1, 0
    %v557 = vsel %vm541, 1, 0
    %v558 = vsel %vm542, 1, 0
    %v559 = vsel %vm543, 1, 0
    %v560 = vsel %vm544, 1, 0
    %v561 = vsel %vm545, 1, 0
    %v562 = vsel %vm546, 1, 0
    %v563 = vsel %vm547, 1, 0
    %v564 = vsel %vm548, 1, 0
    %v565 = vsel %vm549, 1, 0
    %v566 = vsel %vm550, 1, 0
    %v567 = vsel %vm551, 1, 0
    %v568 = vsel %vm552, 1, 0
    %v569 = vsel %vm553, 1, 0
    %v570 = vcvt.s32.f32 %v554
    %v571 = vcvt.s32.f32 %v555
    %v572 = vcvt.s32.f32 %v556
    %v573 = vcvt.s32.f32 %v557
    %v574 = vcvt.s32.f32 %v558
    %v575 = vcvt.s32.f32 %v559
    %v576 = vcvt.s32.f32 %v560
    %v577 = vcvt.s32.f32 %v561
    %v578 = vcvt.s32.f32 %v562
    %v579 = vcvt.s32.f32 %v563
    %v580 = vcvt.s32.f32 %v564
    %v581 = vcvt.s32.f32 %v565
    %v582 = vcvt.s32.f32 %v566
    %v583 = vcvt.s32.f32 %v567
    %v584 = vcvt.s32.f32 %v568
    %v585 = vcvt.s32.f32 %v569
    %vm586 = vcmp.eq.f32.partialorder %v73, 2.0
    %vm587 = vcmp.eq.f32.partialorder %v74, 2.0
    %vm588 = vcmp.eq.f32.partialorder %v75, 2.0
    %vm589 = vcmp.eq.f32.partialorder %v76, 2.0
    %vm590 = vcmp.eq.f32.partialorder %v77, 2.0
    %vm591 = vcmp.eq.f32.partialorder %v78, 2.0
    %vm592 = vcmp.eq.f32.partialorder %v79, 2.0
    %vm593 = vcmp.eq.f32.partialorder %v80, 2.0
    %vm594 = vcmp.eq.f32.partialorder %v81, 2.0
    %vm595 = vcmp.eq.f32.partialorder %v82, 2.0
    %vm596 = vcmp.eq.f32.partialorder %v83, 2.0
    %vm597 = vcmp.eq.f32.partialorder %v84, 2.0
    %vm598 = vcmp.eq.f32.partialorder %v85, 2.0
    %vm599 = vcmp.eq.f32.partialorder %v86, 2.0
    %vm600 = vcmp.eq.f32.partialorder %v87, 2.0
    %vm601 = vcmp.eq.f32.partialorder %v88, 2.0
    %v602 = vsel %vm586, 1, 0
    %v603 = vsel %vm587, 1, 0
    %v604 = vsel %vm588, 1, 0
    %v605 = vsel %vm589, 1, 0
    %v606 = vsel %vm590, 1, 0
    %v607 = vsel %vm591, 1, 0
    %v608 = vsel %vm592, 1, 0
    %v609 = vsel %vm593, 1, 0
    %v610 = vsel %vm594, 1, 0
    %v611 = vsel %vm595, 1, 0
    %v612 = vsel %vm596, 1, 0
    %v613 = vsel %vm597, 1, 0
    %v614 = vsel %vm598, 1, 0
    %v615 = vsel %vm599, 1, 0
    %v616 = vsel %vm600, 1, 0
    %v617 = vsel %vm601, 1, 0
    %v618 = vcvt.s32.f32 %v602
    %v619 = vcvt.s32.f32 %v603
    %v620 = vcvt.s32.f32 %v604
    %v621 = vcvt.s32.f32 %v605
    %v622 = vcvt.s32.f32 %v606
    %v623 = vcvt.s32.f32 %v607
    %v624 = vcvt.s32.f32 %v608
    %v625 = vcvt.s32.f32 %v609
    %v626 = vcvt.s32.f32 %v610
    %v627 = vcvt.s32.f32 %v611
    %v628 = vcvt.s32.f32 %v612
    %v629 = vcvt.s32.f32 %v613
    %v630 = vcvt.s32.f32 %v614
    %v631 = vcvt.s32.f32 %v615
    %v632 = vcvt.s32.f32 %v616
    %v633 = vcvt.s32.f32 %v617
    %635 = vset.pattern.permute.xlu0 0
    %636 = vperm.xlu0 %635, %v89
    %v637 = vpop.permute.xlu0 %636
    %640 = vset.pattern.permute.xlu0 0
    %641 = vperm.xlu0 %640, %v90
    %v642 = vpop.permute.xlu0 %641
    %645 = vset.pattern.permute.xlu0 0
    %646 = vperm.xlu0 %645, %v91
    %v647 = vpop.permute.xlu0 %646
    %650 = vset.pattern.permute.xlu0 0
    %651 = vperm.xlu0 %650, %v92
    %v652 = vpop.permute.xlu0 %651
    %655 = vset.pattern.permute.xlu0 0
    %656 = vperm.xlu0 %655, %v93
    %v657 = vpop.permute.xlu0 %656
    %660 = vset.pattern.permute.xlu0 0
    %661 = vperm.xlu0 %660, %v94
    %v662 = vpop.permute.xlu0 %661
    %665 = vset.pattern.permute.xlu0 0
    %666 = vperm.xlu0 %665, %v95
    %v667 = vpop.permute.xlu0 %666
    %670 = vset.pattern.permute.xlu0 0
    %671 = vperm.xlu0 %670, %v96
    %v672 = vpop.permute.xlu0 %671
    %675 = vset.pattern.permute.xlu0 0
    %676 = vperm.xlu0 %675, %v97
    %v677 = vpop.permute.xlu0 %676
    %680 = vset.pattern.permute.xlu0 0
    %681 = vperm.xlu0 %680, %v98
    %v682 = vpop.permute.xlu0 %681
    %685 = vset.pattern.permute.xlu0 0
    %686 = vperm.xlu0 %685, %v99
    %v687 = vpop.permute.xlu0 %686
    %690 = vset.pattern.permute.xlu0 0
    %691 = vperm.xlu0 %690, %v100
    %v692 = vpop.permute.xlu0 %691
    %695 = vset.pattern.permute.xlu0 0
    %696 = vperm.xlu0 %695, %v101
    %v697 = vpop.permute.xlu0 %696
    %700 = vset.pattern.permute.xlu0 0
    %701 = vperm.xlu0 %700, %v102
    %v702 = vpop.permute.xlu0 %701
    %705 = vset.pattern.permute.xlu0 0
    %706 = vperm.xlu0 %705, %v103
    %v707 = vpop.permute.xlu0 %706
    %710 = vset.pattern.permute.xlu0 0
    %711 = vperm.xlu0 %710, %v104
    %v712 = vpop.permute.xlu0 %711
    %v714 = vmul.f32 %v570, %v637
    %v715 = vmul.f32 %v571, %v642
    %v716 = vmul.f32 %v572, %v647
    %v717 = vmul.f32 %v573, %v652
    %v718 = vmul.f32 %v574, %v657
    %v719 = vmul.f32 %v575, %v662
    %v720 = vmul.f32 %v576, %v667
    %v721 = vmul.f32 %v577, %v672
    %v722 = vmul.f32 %v578, %v677
    %v723 = vmul.f32 %v579, %v682
    %v724 = vmul.f32 %v580, %v687
    %v725 = vmul.f32 %v581, %v692
    %v726 = vmul.f32 %v582, %v697
    %v727 = vmul.f32 %v583, %v702
    %v728 = vmul.f32 %v584, %v707
    %v729 = vmul.f32 %v585, %v712
    %731 = vset.pattern.permute.xlu0 0
    %732 = vperm.xlu0 %731, %v105
    %v733 = vpop.permute.xlu0 %732
    %736 = vset.pattern.permute.xlu0 0
    %737 = vperm.xlu0 %736, %v106
    %v738 = vpop.permute.xlu0 %737
    %741 = vset.pattern.permute.xlu0 0
    %742 = vperm.xlu0 %741, %v107
    %v743 = vpop.permute.xlu0 %742
    %746 = vset.pattern.permute.xlu0 0
    %747 = vperm.xlu0 %746, %v108
    %v748 = vpop.permute.xlu0 %747
    %751 = vset.pattern.permute.xlu0 0
    %752 = vperm.xlu0 %751, %v109
    %v753 = vpop.permute.xlu0 %752
    %756 = vset.pattern.permute.xlu0 0
    %757 = vperm.xlu0 %756, %v110
    %v758 = vpop.permute.xlu0 %757
    %761 = vset.pattern.permute.xlu0 0
    %762 = vperm.xlu0 %761, %v111
    %v763 = vpop.permute.xlu0 %762
    %766 = vset.pattern.permute.xlu0 0
    %767 = vperm.xlu0 %766, %v112
    %v768 = vpop.permute.xlu0 %767
    %771 = vset.pattern.permute.xlu0 0
    %772 = vperm.xlu0 %771, %v113
    %v773 = vpop.permute.xlu0 %772
    %776 = vset.pattern.permute.xlu0 0
    %777 = vperm.xlu0 %776, %v114
    %v778 = vpop.permute.xlu0 %777
    %781 = vset.pattern.permute.xlu0 0
    %782 = vperm.xlu0 %781, %v115
    %v783 = vpop.permute.xlu0 %782
    %786 = vset.pattern.permute.xlu0 0
    %787 = vperm.xlu0 %786, %v116
    %v788 = vpop.permute.xlu0 %787
    %791 = vset.pattern.permute.xlu0 0
    %792 = vperm.xlu0 %791, %v117
    %v793 = vpop.permute.xlu0 %792
    %796 = vset.pattern.permute.xlu0 0
    %797 = vperm.xlu0 %796, %v118
    %v798 = vpop.permute.xlu0 %797
    %801 = vset.pattern.permute.xlu0 0
    %802 = vperm.xlu0 %801, %v119
    %v803 = vpop.permute.xlu0 %802
    %806 = vset.pattern.permute.xlu0 0
    %807 = vperm.xlu0 %806, %v120
    %v808 = vpop.permute.xlu0 %807
    %v810 = vmul.f32 %v618, %v733
    %v811 = vmul.f32 %v619, %v738
    %v812 = vmul.f32 %v620, %v743
    %v813 = vmul.f32 %v621, %v748
    %v814 = vmul.f32 %v622, %v753
    %v815 = vmul.f32 %v623, %v758
    %v816 = vmul.f32 %v624, %v763
    %v817 = vmul.f32 %v625, %v768
    %v818 = vmul.f32 %v626, %v773
    %v819 = vmul.f32 %v627, %v778
    %v820 = vmul.f32 %v628, %v783
    %v821 = vmul.f32 %v629, %v788
    %v822 = vmul.f32 %v630, %v793
    %v823 = vmul.f32 %v631, %v798
    %v824 = vmul.f32 %v632, %v803
    %v825 = vmul.f32 %v633, %v808
    %v826 = vmul.f32 %v810, %v188
    %v827 = vmul.f32 %v811, %v193
    %v828 = vmul.f32 %v812, %v198
    %v829 = vmul.f32 %v813, %v203
    %v830 = vmul.f32 %v814, %v208
    %v831 = vmul.f32 %v815, %v213
    %v832 = vmul.f32 %v816, %v218
    %v833 = vmul.f32 %v817, %v223
    %v834 = vmul.f32 %v818, %v228
    %v835 = vmul.f32 %v819, %v233
    %v836 = vmul.f32 %v820, %v238
    %v837 = vmul.f32 %v821, %v243
    %v838 = vmul.f32 %v822, %v248
    %v839 = vmul.f32 %v823, %v253
    %v840 = vmul.f32 %v824, %v258
    %v841 = vmul.f32 %v825, %v263
    %v842 = vadd.f32 %v714, %v810
    %v843 = vadd.f32 %v715, %v811
    %v844 = vadd.f32 %v716, %v812
    %v845 = vadd.f32 %v717, %v813
    %v846 = vadd.f32 %v718, %v814
    %v847 = vadd.f32 %v719, %v815
    %v848 = vadd.f32 %v720, %v816
    %v849 = vadd.f32 %v721, %v817
    %v850 = vadd.f32 %v722, %v818
    %v851 = vadd.f32 %v723, %v819
    %v852 = vadd.f32 %v724, %v820
    %v853 = vadd.f32 %v725, %v821
    %v854 = vadd.f32 %v726, %v822
    %v855 = vadd.f32 %v727, %v823
    %v856 = vadd.f32 %v728, %v824
    %v857 = vadd.f32 %v729, %v825
    %v858 = vmul.f32 %v842, %v522
    %v859 = vmul.f32 %v843, %v523
    %v860 = vmul.f32 %v844, %v524
    %v861 = vmul.f32 %v845, %v525
    %v862 = vmul.f32 %v846, %v526
    %v863 = vmul.f32 %v847, %v527
    %v864 = vmul.f32 %v848, %v528
    %v865 = vmul.f32 %v849, %v529
    %v866 = vmul.f32 %v850, %v530
    %v867 = vmul.f32 %v851, %v531
    %v868 = vmul.f32 %v852, %v532
    %v869 = vmul.f32 %v853, %v533
    %v870 = vmul.f32 %v854, %v534
    %v871 = vmul.f32 %v855, %v535
    %v872 = vmul.f32 %v856, %v536
    %v873 = vmul.f32 %v857, %v537
    %v874 = vsub.f32 %v826, %v858
    %v875 = vsub.f32 %v827, %v859
    %v876 = vsub.f32 %v828, %v860
    %v877 = vsub.f32 %v829, %v861
    %v878 = vsub.f32 %v830, %v862
    %v879 = vsub.f32 %v831, %v863
    %v880 = vsub.f32 %v832, %v864
    %v881 = vsub.f32 %v833, %v865
    %v882 = vsub.f32 %v834, %v866
    %v883 = vsub.f32 %v835, %v867
    %v884 = vsub.f32 %v836, %v868
    %v885 = vsub.f32 %v837, %v869
    %v886 = vsub.f32 %v838, %v870
    %v887 = vsub.f32 %v839, %v871
    %v888 = vsub.f32 %v840, %v872
    %v889 = vsub.f32 %v841, %v873
    %v890 = vadd.f32 %v874, %v875
    %v891 = vadd.f32 %v890, %v876
    %v892 = vadd.f32 %v891, %v877
    %v893 = vadd.f32 %v892, %v878
    %v894 = vadd.f32 %v893, %v879
    %v895 = vadd.f32 %v894, %v880
    %v896 = vadd.f32 %v895, %v881
    %v897 = vadd.f32 %v896, %v882
    %v898 = vadd.f32 %v897, %v883
    %v899 = vadd.f32 %v898, %v884
    %v900 = vadd.f32 %v899, %v885
    %v901 = vadd.f32 %v900, %v886
    %v902 = vadd.f32 %v901, %v887
    %v903 = vadd.f32 %v902, %v888
    %v904 = vadd.f32 %v903, %v889
    %905 = vadd.xlane.f32.xlu0 %v904
    %v906 = vpop.xlane.xlu0 %905
    %v907 = vrot.slane %v906, 4
    %v908 = vadd.f32 %v906, %v907
    %v909 = vrot.slane %v908, 2
    %v910 = vadd.f32 %v908, %v909
    %v911 = vrot.slane %v910, 1
    %v912 = vadd.f32 %v910, %v911
    %s913 = vtos %v912
    %s914 = scalar_lea.smem [#allocation2], 0
    %915 = sst [smem:[%s914]] %s913
    // Predicated region
    $region22: #{unsupervised_loss.1} parent=1 // pred_check
      _
    $region23: #{unsupervised_loss.1} parent=1 // pred_check_branch
      %917 = sbr.rel (0) target = $region25
    $region24: #{unsupervised_loss.1} parent=1 // pred_region
      %s919 = ssub.s32 16, 16
      %920 = vsyncadd [#allocation3], %s919
      %923 = dma.smem_to_hbm [#allocation2], 16, %s5, [#allocation3]
    $region25: #{unsupervised_loss.1} parent=1 // pred_fallthru
      _
    // Predicated region
    $region26: #{unsupervised_loss.1} parent=1 // pred_check
      _
    $region27: #{unsupervised_loss.1} parent=1 // pred_check_branch
      %925 = sbr.rel (0) target = $region29
    $region28: #{unsupervised_loss.1} parent=1 // pred_region
      %926 = dma.done [#allocation3], 16
    $region29: #{unsupervised_loss.1} parent=1 // pred_fallthru
      _
    %927 = sfence
    %928 = vsyncpa [#allocation3], 1

</llo_original>
